<compile_context>
chip_gen: v7x
topology: tpu7x:2x2x1
jax: 0.10.0
libtpu: 0.0.40
codegen_flags: <defaults>
</compile_context>

<pallas_src>
import functools
import math

import jax
import jax.numpy as jnp
from jax import lax
from jax.experimental import pallas as pl
from jax.experimental.pallas import tpu as pltpu


def _round_up(x, m):
    return ((x + m - 1) // m) * m


def _conv_stats_kernel(x_ref, w_ref, gamma_ref, beta_ref,
                       y_ref, scale_ref, shift_ref,
                       sum_acc, sq_acc,
                       *, K, TL, stride, activation, eps, count):
    n = pl.program_id(0)
    t = pl.program_id(1)

    @pl.when((n == 0) & (t == 0))
    def _init():
        sum_acc[...] = jnp.zeros_like(sum_acc)
        sq_acc[...] = jnp.zeros_like(sq_acc)

    # Conv1d as K tap matmuls on the MXU, f32 accumulation.
    base = t * (TL * stride)
    if (TL * stride) % 8 == 0:
        base = pl.multiple_of(base, 8)

    acc = jnp.zeros(y_ref.shape, jnp.float32)
    for k in range(K):  # K is small and static
        if stride == 1:
            xk = x_ref[pl.ds(base + k, TL), :]
        else:
            xk = x_ref[pl.ds(base + k, TL, stride=stride), :]
        acc = acc + jnp.dot(xk, w_ref[k], preferred_element_type=jnp.float32)

    # Optional activation (before BN, matching the PyTorch module), in f32 (VPU/EUP).
    if activation == "relu":
        acc = jnp.maximum(acc, 0.0)
    elif activation == "tanh":
        acc = jnp.tanh(acc)

    y_ref[...] = acc.astype(y_ref.dtype)

    # Per-tile partial reductions into the persistent (1, C_out_p) accumulators.
    sum_acc[...] += jnp.sum(acc, axis=0, keepdims=True)
    sq_acc[...] += jnp.sum(acc * acc, axis=0, keepdims=True)

    @pl.when((n == pl.num_programs(0) - 1) & (t == pl.num_programs(1) - 1))
    def _finalize():
        inv_count = 1.0 / count
        mean = sum_acc[...] * inv_count
        # Single-pass variance E[y^2] - mean^2, accumulated in f32.
        var = jnp.maximum(sq_acc[...] * inv_count - mean * mean, 0.0)
        scale = gamma_ref[...] * lax.rsqrt(var + eps)
        scale_ref[...] = scale
        shift_ref[...] = beta_ref[...] - mean * scale


def _apply_kernel(y_ref, scale_ref, shift_ref, out_ref):
    # Folded BatchNorm: one FMA per element.
    out_ref[...] = (y_ref[...] * scale_ref[...] + shift_ref[...]).astype(out_ref.dtype)


def batch_norm_conv1d(x, weight, gamma, beta, *, stride, padding,
                      activation=None, eps=1e-5,
                      compute_dtype=jnp.bfloat16, tile_l=512):
    """x: (N, C_in, L) f32, weight: (C_out, C_in, K). Returns (N, C_out, L_out)."""
    N, C_in, L = x.shape
    C_out, _, K = weight.shape
    L_out = (L + 2 * padding - K) // stride + 1
    assert L_out >= 1

    LANE = 128
    C_in_p = _round_up(C_in, LANE)
    C_out_p = _round_up(C_out, LANE)

    # Output-position tile (sublane multiple of 8); pad L_out to a whole tile count.
    TL = min(_round_up(L_out, 8), _round_up(tile_l, 8))
    L_out_pad = _round_up(L_out, TL)
    n_tl = L_out_pad // TL

    # Channels-last, conv-padded input; also covers any padded output positions
    # (which therefore compute exactly 0 and do not perturb the BN statistics).
    L_in_need = (L_out_pad - 1) * stride + K
    L_in_pad = _round_up(max(L_in_need, L + 2 * padding), 8)

    x_cl = jnp.transpose(x, (0, 2, 1))                                  # (N, L, C_in)
    x_cl = jnp.pad(x_cl, ((0, 0),
                          (padding, L_in_pad - L - padding),
                          (0, C_in_p - C_in))).astype(compute_dtype)    # (N, L_in_pad, C_in_p)

    # Weight (C_out, C_in, K) -> (K, C_in_p, C_out_p), zero-padded.
    w = jnp.transpose(weight, (2, 1, 0))                                # (K, C_in, C_out)
    w = jnp.pad(w, ((0, 0), (0, C_in_p - C_in), (0, C_out_p - C_out))).astype(compute_dtype)

    gamma2 = jnp.pad(gamma.astype(jnp.float32), (0, C_out_p - C_out)).reshape(1, C_out_p)
    beta2 = jnp.pad(beta.astype(jnp.float32), (0, C_out_p - C_out)).reshape(1, C_out_p)

    count = float(N * L_out)  # true number of rows in the batch statistics

    itemsize = jnp.dtype(compute_dtype).itemsize
    bytes_x = N * L_in_pad * C_in_p * itemsize
    bytes_w = K * C_in_p * C_out_p * itemsize
    bytes_y = N * L_out_pad * C_out_p * 4
    vmem_limit = 32 * 1024 * 1024

    kernel1 = functools.partial(_conv_stats_kernel, K=K, TL=TL, stride=stride,
                                activation=activation, eps=eps, count=count)

    # ---- pass 1: conv + activation + batch statistics (sequential accumulator) ----
    y, scale, shift = pl.pallas_call(
        kernel1,
        out_shape=(
            jax.ShapeDtypeStruct((N, L_out_pad, C_out_p), jnp.float32),
            jax.ShapeDtypeStruct((1, C_out_p), jnp.float32),
            jax.ShapeDtypeStruct((1, C_out_p), jnp.float32),
        ),
        grid=(N, n_tl),
        in_specs=[
            # whole per-batch sequence; re-DMA'd only when the batch index changes
            pl.BlockSpec((None, L_in_pad, C_in_p), lambda n, t: (n, 0, 0)),
            pl.BlockSpec((K, C_in_p, C_out_p), lambda n, t: (0, 0, 0)),
            pl.BlockSpec((1, C_out_p), lambda n, t: (0, 0)),
            pl.BlockSpec((1, C_out_p), lambda n, t: (0, 0)),
        ],
        out_specs=(
            pl.BlockSpec((None, TL, C_out_p), lambda n, t: (n, t, 0)),
            pl.BlockSpec((1, C_out_p), lambda n, t: (0, 0)),
            pl.BlockSpec((1, C_out_p), lambda n, t: (0, 0)),
        ),
        scratch_shapes=[
            pltpu.VMEM((1, C_out_p), jnp.float32),   # per-channel sum
            pltpu.VMEM((1, C_out_p), jnp.float32),   # per-channel sum of squares
        ],
        compiler_params=pltpu.CompilerParams(
            dimension_semantics=("arbitrary", "arbitrary"),
            vmem_limit_bytes=vmem_limit),
        cost_estimate=pl.CostEstimate(
            flops=2 * N * L_out_pad * K * C_in_p * C_out_p + 4 * N * L_out_pad * C_out_p,
            transcendentals=(N * L_out_pad * C_out_p) if activation == "tanh" else 0,
            bytes_accessed=bytes_x + bytes_w + bytes_y),
    )(x_cl, w, gamma2, beta2)

    # ---- pass 2: apply folded scale/shift (embarrassingly parallel over tiles) ----
    out = pl.pallas_call(
        _apply_kernel,
        out_shape=jax.ShapeDtypeStruct((N, L_out_pad, C_out_p), x.dtype),
        grid=(N, n_tl),
        in_specs=[
            pl.BlockSpec((None, TL, C_out_p), lambda n, t: (n, t, 0)),
            pl.BlockSpec((1, C_out_p), lambda n, t: (0, 0)),
            pl.BlockSpec((1, C_out_p), lambda n, t: (0, 0)),
        ],
        out_specs=pl.BlockSpec((None, TL, C_out_p), lambda n, t: (n, t, 0)),
        compiler_params=pltpu.CompilerParams(
            dimension_semantics=("parallel", "parallel"),
            vmem_limit_bytes=vmem_limit),
        cost_estimate=pl.CostEstimate(
            flops=2 * N * L_out_pad * C_out_p,
            transcendentals=0,
            bytes_accessed=2 * bytes_y),
    )(y, scale, shift)

    # Drop padding, back to PyTorch layout (N, C_out, L_out).
    return jnp.transpose(out[:, :L_out, :C_out], (0, 2, 1))


def xavier_uniform_conv1d(key, out_dim, in_dim, kernel_size, gain=1.0):
    # matches torch.nn.init.xavier_uniform_ on a Conv1d weight (fan includes receptive field)
    fan_in = in_dim * kernel_size
    fan_out = out_dim * kernel_size
    a = gain * math.sqrt(6.0 / (fan_in + fan_out))
    return jax.random.uniform(key, (out_dim, in_dim, kernel_size), jnp.float32, -a, a)


def _reference(x, weight, gamma, beta, *, stride, padding, activation, eps=1e-5):
    y = lax.conv_general_dilated(
        x, weight, window_strides=(stride,), padding=[(padding, padding)],
        dimension_numbers=("NCH", "OIH", "NCH"))
    if activation == "relu":
        y = jnp.maximum(y, 0.0)
    elif activation == "tanh":
        y = jnp.tanh(y)
    mean = jnp.mean(y, axis=(0, 2), keepdims=True)
    var = jnp.mean((y - mean) ** 2, axis=(0, 2), keepdims=True)
    y_hat = (y - mean) * lax.rsqrt(var + eps)
    return y_hat * gamma.reshape(1, -1, 1) + beta.reshape(1, -1, 1)


if __name__ == "__main__":
    # small shapes consistent with the module: batch=2, in_dim=4, out_dim=8, L=16
    N, C_in, C_out, L = 2, 4, 8, 16
    K, stride, padding = 3, 1, 1
    activation = "relu"   # nn.ReLU() analogue; None for the module default

    key = jax.random.PRNGKey(0)
    kx, kw = jax.random.split(key)
    x = jax.random.normal(kx, (N, C_in, L), jnp.float32)
    weight = xavier_uniform_conv1d(kw, C_out, C_in, K, gain=1.0)  # w_init_gain='linear'
    gamma = jnp.ones((C_out,), jnp.float32)    # BatchNorm1d weight init
    beta = jnp.zeros((C_out,), jnp.float32)    # BatchNorm1d bias init

    L_out = (L + 2 * padding - K) // stride + 1
    ref = _reference(x, weight, gamma, beta, stride=stride, padding=padding,
                     activation=activation)

    # f32 MXU operands: tight check against the f32 XLA reference.
    out_f32 = batch_norm_conv1d(x, weight, gamma, beta, stride=stride, padding=padding,
                                activation=activation, compute_dtype=jnp.float32)
    out_f32 = jax.block_until_ready(out_f32)
    assert out_f32.shape == (N, C_out, L_out)
    assert jnp.allclose(out_f32, ref, atol=1e-4, rtol=1e-4)

    # bf16 MXU operands (perf default on v6e/v7x), f32 accumulation / BN math.
    out_bf16 = batch_norm_conv1d(x, weight, gamma, beta, stride=stride, padding=padding,
                                 activation=activation, compute_dtype=jnp.bfloat16)
    out_bf16 = jax.block_until_ready(out_bf16)
    assert out_bf16.shape == (N, C_out, L_out)
    assert jnp.allclose(out_bf16, ref, atol=5e-2, rtol=5e-2)

    print("KERNEL_OK")
</pallas_src>

<mosaic_0001>
module attributes {stable_mosaic.version = 11 : i64} {
  func.func @_conv_stats_kernel(%arg0: i32, %arg1: i32, %arg2: memref<1x24x128xf32, #tpu.memory_space<vmem>>, %arg3: memref<3x128x128xf32, #tpu.memory_space<vmem>>, %arg4: memref<1x128xf32, #tpu.memory_space<vmem>>, %arg5: memref<1x128xf32, #tpu.memory_space<vmem>>, %arg6: memref<1x16x128xf32, #tpu.memory_space<vmem>>, %arg7: memref<1x128xf32, #tpu.memory_space<vmem>>, %arg8: memref<1x128xf32, #tpu.memory_space<vmem>>, %arg9: memref<1x128xf32, #tpu.memory_space<vmem>>, %arg10: memref<1x128xf32, #tpu.memory_space<vmem>>) attributes {dimension_semantics = [#tpu.dimension_semantics<arbitrary>, #tpu.dimension_semantics<arbitrary>], iteration_bounds = array<i64: 2, 1>, scalar_prefetch = 0 : i64, scratch_operands = 2 : i64, tpu.core_type = #tpu.core_type<tc>, window_params = [{transform_indices = @transform_0, window_bounds = array<i64: 1, 24, 128>}, {pipeline_mode = #tpu.pipeline_mode<synchronous>, transform_indices = @transform_1, window_bounds = array<i64: 3, 128, 128>}, {pipeline_mode = #tpu.pipeline_mode<synchronous>, transform_indices = @transform_2, window_bounds = array<i64: 1, 128>}, {pipeline_mode = #tpu.pipeline_mode<synchronous>, transform_indices = @transform_3, window_bounds = array<i64: 1, 128>}, {transform_indices = @transform_4, window_bounds = array<i64: 1, 16, 128>}, {pipeline_mode = #tpu.pipeline_mode<synchronous>, transform_indices = @transform_5, window_bounds = array<i64: 1, 128>}, {pipeline_mode = #tpu.pipeline_mode<synchronous>, transform_indices = @transform_6, window_bounds = array<i64: 1, 128>}]} {
    %c0_i32 = arith.constant 0 : i32
    %0 = arith.cmpi eq, %arg0, %c0_i32 : i32
    %c0_i32_0 = arith.constant 0 : i32
    %1 = arith.cmpi eq, %arg1, %c0_i32_0 : i32
    %2 = arith.andi %0, %1 : i1
    %3 = arith.extui %2 : i1 to i32
    %c0_i32_1 = arith.constant 0 : i32
    %4 = arith.cmpi ne, %3, %c0_i32_1 : i32
    scf.if %4 {
      %cst_35 = arith.constant 0.000000e+00 : f32
      %53 = vector.broadcast %cst_35 : f32 to vector<1x128xf32>
      %c0_36 = arith.constant 0 : index
      %c0_37 = arith.constant 0 : index
      %54 = vector.load %arg9[%c0_36, %c0_37] : memref<1x128xf32, #tpu.memory_space<vmem>>, vector<1x128xf32>
      tpu.vector_store %arg9[%c0_36, %c0_37], %53 {strides = array<i32>} : memref<1x128xf32, #tpu.memory_space<vmem>>, vector<1x128xf32>,
      %cst_38 = arith.constant 0.000000e+00 : f32
      %55 = vector.broadcast %cst_38 : f32 to vector<1x128xf32>
      %c0_39 = arith.constant 0 : index
      %c0_40 = arith.constant 0 : index
      %56 = vector.load %arg10[%c0_39, %c0_40] : memref<1x128xf32, #tpu.memory_space<vmem>>, vector<1x128xf32>
      tpu.vector_store %arg10[%c0_39, %c0_40], %55 {strides = array<i32>} : memref<1x128xf32, #tpu.memory_space<vmem>>, vector<1x128xf32>,
    } else {
    }
    %c16_i32 = arith.constant 16 : i32
    %5 = arith.muli %arg1, %c16_i32 : i32
    %6 = tpu.assume_multiple %5, 8 : i32
    %cst = arith.constant 0.000000e+00 : f32
    %7 = vector.broadcast %cst : f32 to vector<16x128xf32>
    %c0_i32_2 = arith.constant 0 : i32
    %8 = arith.addi %6, %c0_i32_2 : i32
    %c0 = arith.constant 0 : index
    %9 = arith.index_cast %8 : i32 to index
    %c0_3 = arith.constant 0 : index
    %10 = vector.load %arg2[%c0, %9, %c0_3] : memref<1x24x128xf32, #tpu.memory_space<vmem>>, vector<1x16x128xf32>
    %11 = vector.shape_cast %10 : vector<1x16x128xf32> to vector<16x128xf32>
    %c0_4 = arith.constant 0 : index
    %c0_5 = arith.constant 0 : index
    %c0_6 = arith.constant 0 : index
    %12 = vector.load %arg3[%c0_4, %c0_5, %c0_6] : memref<3x128x128xf32, #tpu.memory_space<vmem>>, vector<1x128x128xf32>
    %13 = vector.shape_cast %12 : vector<1x128x128xf32> to vector<128x128xf32>
    %cst_7 = arith.constant dense<0.000000e+00> : vector<16x128xf32>
    %14 = tpu.matmul %11, %13, %cst_7 {dimension_numbers = #tpu.dot_dimension_numbers<[1], [0], [0], [1], [0, 0, 1, 1], [], []>} : vector<16x128xf32>, vector<128x128xf32>, vector<16x128xf32> -> vector<16x128xf32>
    %15 = arith.addf %7, %14 : vector<16x128xf32>
    %c1_i32 = arith.constant 1 : i32
    %16 = arith.addi %6, %c1_i32 : i32
    %c0_8 = arith.constant 0 : index
    %17 = arith.index_cast %16 : i32 to index
    %c0_9 = arith.constant 0 : index
    %18 = vector.load %arg2[%c0_8, %17, %c0_9] : memref<1x24x128xf32, #tpu.memory_space<vmem>>, vector<1x16x128xf32>
    %19 = vector.shape_cast %18 : vector<1x16x128xf32> to vector<16x128xf32>
    %c1 = arith.constant 1 : index
    %c0_10 = arith.constant 0 : index
    %c0_11 = arith.constant 0 : index
    %20 = vector.load %arg3[%c1, %c0_10, %c0_11] : memref<3x128x128xf32, #tpu.memory_space<vmem>>, vector<1x128x128xf32>
    %21 = vector.shape_cast %20 : vector<1x128x128xf32> to vector<128x128xf32>
    %cst_12 = arith.constant dense<0.000000e+00> : vector<16x128xf32>
    %22 = tpu.matmul %19, %21, %cst_12 {dimension_numbers = #tpu.dot_dimension_numbers<[1], [0], [0], [1], [0, 0, 1, 1], [], []>} : vector<16x128xf32>, vector<128x128xf32>, vector<16x128xf32> -> vector<16x128xf32>
    %23 = arith.addf %15, %22 : vector<16x128xf32>
    %c2_i32 = arith.constant 2 : i32
    %24 = arith.addi %6, %c2_i32 : i32
    %c0_13 = arith.constant 0 : index
    %25 = arith.index_cast %24 : i32 to index
    %c0_14 = arith.constant 0 : index
    %26 = vector.load %arg2[%c0_13, %25, %c0_14] : memref<1x24x128xf32, #tpu.memory_space<vmem>>, vector<1x16x128xf32>
    %27 = vector.shape_cast %26 : vector<1x16x128xf32> to vector<16x128xf32>
    %c2 = arith.constant 2 : index
    %c0_15 = arith.constant 0 : index
    %c0_16 = arith.constant 0 : index
    %28 = vector.load %arg3[%c2, %c0_15, %c0_16] : memref<3x128x128xf32, #tpu.memory_space<vmem>>, vector<1x128x128xf32>
    %29 = vector.shape_cast %28 : vector<1x128x128xf32> to vector<128x128xf32>
    %cst_17 = arith.constant dense<0.000000e+00> : vector<16x128xf32>
    %30 = tpu.matmul %27, %29, %cst_17 {dimension_numbers = #tpu.dot_dimension_numbers<[1], [0], [0], [1], [0, 0, 1, 1], [], []>} : vector<16x128xf32>, vector<128x128xf32>, vector<16x128xf32> -> vector<16x128xf32>
    %31 = arith.addf %23, %30 : vector<16x128xf32>
    %cst_18 = arith.constant 0.000000e+00 : f32
    %32 = vector.broadcast %cst_18 : f32 to vector<16x128xf32>
    %33 = arith.maximumf %31, %32 : vector<16x128xf32>
    %c0_19 = arith.constant 0 : index
    %c0_20 = arith.constant 0 : index
    %c0_21 = arith.constant 0 : index
    %34 = vector.load %arg6[%c0_19, %c0_20, %c0_21] : memref<1x16x128xf32, #tpu.memory_space<vmem>>, vector<1x16x128xf32>
    %35 = vector.shape_cast %34 : vector<1x16x128xf32> to vector<16x128xf32>
    %36 = vector.shape_cast %33 : vector<16x128xf32> to vector<1x16x128xf32>
    tpu.vector_store %arg6[%c0_19, %c0_20, %c0_21], %36 {strides = array<i32>} : memref<1x16x128xf32, #tpu.memory_space<vmem>>, vector<1x16x128xf32>,
    %c0_22 = arith.constant 0 : index
    %c0_23 = arith.constant 0 : index
    %37 = vector.load %arg9[%c0_22, %c0_23] : memref<1x128xf32, #tpu.memory_space<vmem>>, vector<1x128xf32>
    %cst_24 = arith.constant dense<0.000000e+00> : vector<128xf32>
    %38 = vector.multi_reduction <add>, %33, %cst_24 [0] : vector<16x128xf32> to vector<128xf32>
    %39 = vector.shape_cast %38 : vector<128xf32> to vector<1x128xf32>
    %40 = arith.addf %37, %39 : vector<1x128xf32>
    %c0_25 = arith.constant 0 : index
    %c0_26 = arith.constant 0 : index
    %41 = vector.load %arg9[%c0_25, %c0_26] : memref<1x128xf32, #tpu.memory_space<vmem>>, vector<1x128xf32>
    tpu.vector_store %arg9[%c0_25, %c0_26], %40 {strides = array<i32>} : memref<1x128xf32, #tpu.memory_space<vmem>>, vector<1x128xf32>,
    %c0_27 = arith.constant 0 : index
    %c0_28 = arith.constant 0 : index
    %42 = vector.load %arg10[%c0_27, %c0_28] : memref<1x128xf32, #tpu.memory_space<vmem>>, vector<1x128xf32>
    %43 = arith.mulf %33, %33 : vector<16x128xf32>
    %cst_29 = arith.constant dense<0.000000e+00> : vector<128xf32>
    %44 = vector.multi_reduction <add>, %43, %cst_29 [0] : vector<16x128xf32> to vector<128xf32>
    %45 = vector.shape_cast %44 : vector<128xf32> to vector<1x128xf32>
    %46 = arith.addf %42, %45 : vector<1x128xf32>
    %c0_30 = arith.constant 0 : index
    %c0_31 = arith.constant 0 : index
    %47 = vector.load %arg10[%c0_30, %c0_31] : memref<1x128xf32, #tpu.memory_space<vmem>>, vector<1x128xf32>
    tpu.vector_store %arg10[%c0_30, %c0_31], %46 {strides = array<i32>} : memref<1x128xf32, #tpu.memory_space<vmem>>, vector<1x128xf32>,
    %c1_i32_32 = arith.constant 1 : i32
    %48 = arith.cmpi eq, %arg0, %c1_i32_32 : i32
    %c0_i32_33 = arith.constant 0 : i32
    %49 = arith.cmpi eq, %arg1, %c0_i32_33 : i32
    %50 = arith.andi %48, %49 : i1
    %51 = arith.extui %50 : i1 to i32
    %c0_i32_34 = arith.constant 0 : i32
    %52 = arith.cmpi ne, %51, %c0_i32_34 : i32
    scf.if %52 {
      %c0_35 = arith.constant 0 : index
      %c0_36 = arith.constant 0 : index
      %53 = vector.load %arg9[%c0_35, %c0_36] : memref<1x128xf32, #tpu.memory_space<vmem>>, vector<1x128xf32>
      %cst_37 = arith.constant 3.125000e-02 : f32
      %54 = vector.broadcast %cst_37 : f32 to vector<1x128xf32>
      %55 = arith.mulf %53, %54 : vector<1x128xf32>
      %c0_38 = arith.constant 0 : index
      %c0_39 = arith.constant 0 : index
      %56 = vector.load %arg10[%c0_38, %c0_39] : memref<1x128xf32, #tpu.memory_space<vmem>>, vector<1x128xf32>
      %cst_40 = arith.constant 3.125000e-02 : f32
      %57 = vector.broadcast %cst_40 : f32 to vector<1x128xf32>
      %58 = arith.mulf %56, %57 : vector<1x128xf32>
      %59 = arith.mulf %55, %55 : vector<1x128xf32>
      %60 = arith.subf %58, %59 : vector<1x128xf32>
      %cst_41 = arith.constant 0.000000e+00 : f32
      %61 = vector.broadcast %cst_41 : f32 to vector<1x128xf32>
      %62 = arith.maximumf %60, %61 : vector<1x128xf32>
      %c0_42 = arith.constant 0 : index
      %c0_43 = arith.constant 0 : index
      %63 = vector.load %arg4[%c0_42, %c0_43] : memref<1x128xf32, #tpu.memory_space<vmem>>, vector<1x128xf32>
      %cst_44 = arith.constant 9.99999974E-6 : f32
      %64 = vector.broadcast %cst_44 : f32 to vector<1x128xf32>
      %65 = arith.addf %62, %64 : vector<1x128xf32>
      %66 = math.rsqrt %65 : vector<1x128xf32>
      %67 = arith.mulf %63, %66 : vector<1x128xf32>
      %c0_45 = arith.constant 0 : index
      %c0_46 = arith.constant 0 : index
      %68 = vector.load %arg7[%c0_45, %c0_46] : memref<1x128xf32, #tpu.memory_space<vmem>>, vector<1x128xf32>
      tpu.vector_store %arg7[%c0_45, %c0_46], %67 {strides = array<i32>} : memref<1x128xf32, #tpu.memory_space<vmem>>, vector<1x128xf32>,
      %c0_47 = arith.constant 0 : index
      %c0_48 = arith.constant 0 : index
      %69 = vector.load %arg5[%c0_47, %c0_48] : memref<1x128xf32, #tpu.memory_space<vmem>>, vector<1x128xf32>
      %70 = arith.mulf %55, %67 : vector<1x128xf32>
      %71 = arith.subf %69, %70 : vector<1x128xf32>
      %c0_49 = arith.constant 0 : index
      %c0_50 = arith.constant 0 : index
      %72 = vector.load %arg8[%c0_49, %c0_50] : memref<1x128xf32, #tpu.memory_space<vmem>>, vector<1x128xf32>
      tpu.vector_store %arg8[%c0_49, %c0_50], %71 {strides = array<i32>} : memref<1x128xf32, #tpu.memory_space<vmem>>, vector<1x128xf32>,
    } else {
    }
    return
  }
  func.func @transform_0(%arg0: i32, %arg1: i32) -> (i32, i32, i32) {
    %c0_i32 = arith.constant 0 : i32
    %c0_i32_0 = arith.constant 0 : i32
    %c0_i32_1 = arith.constant 0 : i32
    return %arg0, %c0_i32, %c0_i32_0 : i32, i32, i32
  }
  func.func @transform_1(%arg0: i32, %arg1: i32) -> (i32, i32, i32) {
    %c0_i32 = arith.constant 0 : i32
    %c0_i32_0 = arith.constant 0 : i32
    %c0_i32_1 = arith.constant 0 : i32
    %c0_i32_2 = arith.constant 0 : i32
    return %c0_i32, %c0_i32_0, %c0_i32_1 : i32, i32, i32
  }
  func.func @transform_2(%arg0: i32, %arg1: i32) -> (i32, i32) {
    %c0_i32 = arith.constant 0 : i32
    %c0_i32_0 = arith.constant 0 : i32
    %c0_i32_1 = arith.constant 0 : i32
    return %c0_i32, %c0_i32_0 : i32, i32
  }
  func.func @transform_3(%arg0: i32, %arg1: i32) -> (i32, i32) {
    %c0_i32 = arith.constant 0 : i32
    %c0_i32_0 = arith.constant 0 : i32
    %c0_i32_1 = arith.constant 0 : i32
    return %c0_i32, %c0_i32_0 : i32, i32
  }
  func.func @transform_4(%arg0: i32, %arg1: i32) -> (i32, i32, i32) {
    %c0_i32 = arith.constant 0 : i32
    %c0_i32_0 = arith.constant 0 : i32
    return %arg0, %arg1, %c0_i32 : i32, i32, i32
  }
  func.func @transform_5(%arg0: i32, %arg1: i32) -> (i32, i32) {
    %c0_i32 = arith.constant 0 : i32
    %c0_i32_0 = arith.constant 0 : i32
    %c0_i32_1 = arith.constant 0 : i32
    return %c0_i32, %c0_i32_0 : i32, i32
  }
  func.func @transform_6(%arg0: i32, %arg1: i32) -> (i32, i32) {
    %c0_i32 = arith.constant 0 : i32
    %c0_i32_0 = arith.constant 0 : i32
    %c0_i32_1 = arith.constant 0 : i32
    return %c0_i32, %c0_i32_0 : i32, i32
  }
}

</mosaic_0001>

<llo_original>
// kernel: tpu_custom_call.1
$region0: #{tpu_custom_call.1}
  #allocation0 [shape = 'u32[]', space=smem, size = 0x4, offset = 0x4, fixed_abs, tag = 'smem constant byte address 0x4 - core index']
  #allocation1 [shape = 'u32[144,128]{1,0:T(1,128)}', space=vmem, size = 0x12000, scoped, tag = 'internal scratch']
  #allocation2 [shape = 'f32[1,128]{1,0:T(1,128)}', space=vmem, size = 0x200, scoped, tag = 'scratch operand']
  #allocation3 [shape = 'f32[1,128]{1,0:T(1,128)}', space=vmem, size = 0x200, scoped, tag = 'scratch operand']
  %s0 = inlined_call_operand.hbm [shape: f32[2,24,128], index: 0, kind: input, shape index: {}]
  %s1 = inlined_call_operand.hbm [shape: f32[3,128,128], index: 1, kind: input, shape index: {}]
  %s2 = inlined_call_operand.vmem [shape: f32[1,128], index: 2, kind: input, shape index: {}]
  %s3 = inlined_call_operand.vmem [shape: f32[1,128], index: 3, kind: input, shape index: {}]
  %s4 = inlined_call_operand.hbm [shape: f32[2,16,128], index: 4, kind: output, shape index: {0}]
  %s5 = inlined_call_operand.hbm [shape: f32[1,128], index: 5, kind: output, shape index: {1}]
  %s6 = inlined_call_operand.hbm [shape: f32[1,128], index: 6, kind: output, shape index: {2}]
  %7 = xla_tuple %s4, %s5, %s6
  %s8 = sld [smem:[#allocation0]]
  $region81: #{tpu_custom_call.1} parent=0
    _
  %s10 = ssub.s32 1, %s8
  %s11 = scalar_select 0, %s10, %s8
  $region1: #{tpu_custom_call.1} parent=0
    #allocation4 [shape = 'u8[24576]{0}', space=vmem, size = 0x6000, scoped, tag = 'input window, operand 0']
    #allocation5 [shape = 's32[2]{0}', space=sflag, size = 0x8, scoped, tag = 'scoped memory for tpu_custom_call.1']
    #allocation6 [shape = 's32[2]{0}', space=sflag, size = 0x8, scoped, tag = 'scoped memory for tpu_custom_call.1']
    #allocation7 [shape = 'u8[196608]{0}', space=vmem, size = 0x30000, scoped, tag = 'input window, operand 1, single buffered']
    #allocation8 [shape = 's32[1]{0}', space=sflag, size = 0x4, scoped, tag = 'scoped memory for tpu_custom_call.1']
    #allocation9 [shape = 'u8[16384]{0}', space=vmem, size = 0x4000, scoped, tag = 'output window, operand 0']
    #allocation10 [shape = 'u8[512]{0}', space=vmem, size = 0x400, scoped, tag = 'output window, operand 1, single buffered']
    #allocation11 [shape = 's32[1]{0}', space=sflag, size = 0x4, scoped, tag = 'scoped memory for tpu_custom_call.1']
    #allocation12 [shape = 'u8[512]{0}', space=vmem, size = 0x400, scoped, tag = 'output window, operand 2, single buffered']
    %12 = vsyncpa [#allocation5], 0
    %s13 = scalar_lea.sflag [#allocation5], 1
    %14 = vsyncpa %s13, 0
    %15 = vsyncpa [#allocation8], 0
    %16 = vsyncpa [#allocation6], 0
    %s17 = scalar_lea.sflag [#allocation6], 1
    %18 = vsyncpa %s17, 0
    %19 = vsyncpa [#allocation11], 0
    loop: start=0, step=1, limit=4
    $region2: #{tpu_custom_call.1} parent=1 // loop_pre_header
      _
    $region3: #{tpu_custom_call.1} parent=1 // loop_header
      %s21 = sphi 0, %s25
      %p22 = scmp.ge.s32.totalorder %s21, 4
      %s28 = sphi 0, %s40
      %s29 = sphi 0, %s36
      %s30 = sphi 0, %s28
      %s31 = sphi 0, %s29
      %s32 = sphi 0, %s30
      %s33 = sphi 0, %s31
      %s43 = sphi 0, %s45
      %s46 = sphi 0, %s43
      %s47 = sphi 0, %s46
      %s63 = sphi 0, %s47
      %s67 = sphi 0, %s67
      %s69 = sphi 0, %s67
      %s70 = sphi 0, %s69
      %s84 = sphi 0, %s70
      %s88 = sphi 0, %s88
      %s90 = sphi 0, %s88
      %s91 = sphi 0, %s90
      %s105 = sphi 0, %s91
      %s109 = sphi 0, %s109
      %s111 = sphi 0, %s109
      %s112 = sphi 0, %s111
      %s126 = sphi 0, %s112
      %s134 = sphi 0, %s136
      %s137 = sphi 0, %s134
      %s138 = sphi 0, %s137
      %s154 = sphi 0, %s138
      %s158 = sphi 0, %s158
      %s160 = sphi 0, %s158
      %s161 = sphi 0, %s160
      %s175 = sphi 0, %s161
      %s179 = sphi 0, %s179
      %s181 = sphi 0, %s179
      %s182 = sphi 0, %s181
      %s196 = sphi 0, %s182
    $region4: #{tpu_custom_call.1} parent=1 // loop_header_branch
      %24 = sbr.rel (%p22) target = $region8
    $region5: #{tpu_custom_call.1} parent=1 // loop_body
      %s26 = ssub.s32 %s21, 1
      %s27 = ssub.s32 %s21, 2
      %s34 = sadd.s32 1, %s29
      %p35 = scmp.ge.s32.totalorder %s34, 1
      %s36 = scalar_select %p35, 0, %s34
      %s37 = sadd.s32 1, %s28
      %s38 = scalar_select %p35, %s37, %s28
      %p39 = scmp.ge.s32.totalorder %s38, 2
      %s40 = scalar_select %p39, 0, %s38
      %s41 = ssub.s32 %s28, %s40
      %p42 = scmp.eq.s32.totalorder %s41, 0
      %s44 = sadd.s32 %s43, 1
      %s45 = scalar_select %p42, %s43, %s44
      %p48 = pneg %p42
      %p49 = scmp.eq.s32.totalorder %s21, 1
      %p50 = por %p48, %p49
      %p51 = scmp.ne.s32.totalorder %s43, %s46
      %p52 = scmp.eq.s32.totalorder %s21, 0
      %p53 = por %p51, %p52
      %p54 = scmp.ne.s32.totalorder %s43, %s46
      %p55 = scmp.eq.s32.totalorder %s26, 1
      %p56 = por %p54, %p55
      %p57 = scmp.ne.s32.totalorder %s46, %s47
      %p58 = scmp.eq.s32.totalorder %s26, 0
      %p59 = por %p57, %p58
      %p60 = scmp.ne.s32.totalorder %s46, %s47
      %p61 = scmp.eq.s32.totalorder %s27, 1
      %p62 = por %p60, %p61
      %p64 = scmp.ne.s32.totalorder %s47, %s63
      %p65 = scmp.eq.s32.totalorder %s27, 0
      %p66 = por %p64, %p65
      %s68 = sadd.s32 %s67, 1
      %p71 = scmp.eq.s32.totalorder %s21, 1
      %p72 = scmp.ne.s32.totalorder %s67, %s69
      %p73 = scmp.eq.s32.totalorder %s21, 0
      %p74 = por %p72, %p73
      %p75 = scmp.ne.s32.totalorder %s67, %s69
      %p76 = scmp.eq.s32.totalorder %s26, 1
      %p77 = por %p75, %p76
      %p78 = scmp.ne.s32.totalorder %s69, %s70
      %p79 = scmp.eq.s32.totalorder %s26, 0
      %p80 = por %p78, %p79
      %p81 = scmp.ne.s32.totalorder %s69, %s70
      %p82 = scmp.eq.s32.totalorder %s27, 1
      %p83 = por %p81, %p82
      %p85 = scmp.ne.s32.totalorder %s70, %s84
      %p86 = scmp.eq.s32.totalorder %s27, 0
      %p87 = por %p85, %p86
      %s89 = sadd.s32 %s88, 1
      %p92 = scmp.eq.s32.totalorder %s21, 1
      %p93 = scmp.ne.s32.totalorder %s88, %s90
      %p94 = scmp.eq.s32.totalorder %s21, 0
      %p95 = por %p93, %p94
      %p96 = scmp.ne.s32.totalorder %s88, %s90
      %p97 = scmp.eq.s32.totalorder %s26, 1
      %p98 = por %p96, %p97
      %p99 = scmp.ne.s32.totalorder %s90, %s91
      %p100 = scmp.eq.s32.totalorder %s26, 0
      %p101 = por %p99, %p100
      %p102 = scmp.ne.s32.totalorder %s90, %s91
      %p103 = scmp.eq.s32.totalorder %s27, 1
      %p104 = por %p102, %p103
      %p106 = scmp.ne.s32.totalorder %s91, %s105
      %p107 = scmp.eq.s32.totalorder %s27, 0
      %p108 = por %p106, %p107
      %s110 = sadd.s32 %s109, 1
      %p113 = scmp.eq.s32.totalorder %s21, 1
      %p114 = scmp.ne.s32.totalorder %s109, %s111
      %p115 = scmp.eq.s32.totalorder %s21, 0
      %p116 = por %p114, %p115
      %p117 = scmp.ne.s32.totalorder %s109, %s111
      %p118 = scmp.eq.s32.totalorder %s26, 1
      %p119 = por %p117, %p118
      %p120 = scmp.ne.s32.totalorder %s111, %s112
      %p121 = scmp.eq.s32.totalorder %s26, 0
      %p122 = por %p120, %p121
      %p123 = scmp.ne.s32.totalorder %s111, %s112
      %p124 = scmp.eq.s32.totalorder %s27, 1
      %p125 = por %p123, %p124
      %p127 = scmp.ne.s32.totalorder %s112, %s126
      %p128 = scmp.eq.s32.totalorder %s27, 0
      %p129 = por %p127, %p128
      %s130 = ssub.s32 %s28, %s40
      %s131 = ssub.s32 %s29, %s36
      %s132 = sor.u32 %s130, %s131
      %p133 = scmp.eq.s32.totalorder %s132, 0
      %s135 = sadd.s32 %s134, 1
      %s136 = scalar_select %p133, %s134, %s135
      %p139 = pneg %p133
      %p140 = scmp.eq.s32.totalorder %s21, 1
      %p141 = por %p139, %p140
      %p142 = scmp.ne.s32.totalorder %s134, %s137
      %p143 = scmp.eq.s32.totalorder %s21, 0
      %p144 = por %p142, %p143
      %p145 = scmp.ne.s32.totalorder %s134, %s137
      %p146 = scmp.eq.s32.totalorder %s26, 1
      %p147 = por %p145, %p146
      %p148 = scmp.ne.s32.totalorder %s137, %s138
      %p149 = scmp.eq.s32.totalorder %s26, 0
      %p150 = por %p148, %p149
      %p151 = scmp.ne.s32.totalorder %s137, %s138
      %p152 = scmp.eq.s32.totalorder %s27, 1
      %p153 = por %p151, %p152
      %p155 = scmp.ne.s32.totalorder %s138, %s154
      %p156 = scmp.eq.s32.totalorder %s27, 0
      %p157 = por %p155, %p156
      %s159 = sadd.s32 %s158, 1
      %p162 = scmp.eq.s32.totalorder %s21, 1
      %p163 = scmp.ne.s32.totalorder %s158, %s160
      %p164 = scmp.eq.s32.totalorder %s21, 0
      %p165 = por %p163, %p164
      %p166 = scmp.ne.s32.totalorder %s158, %s160
      %p167 = scmp.eq.s32.totalorder %s26, 1
      %p168 = por %p166, %p167
      %p169 = scmp.ne.s32.totalorder %s160, %s161
      %p170 = scmp.eq.s32.totalorder %s26, 0
      %p171 = por %p169, %p170
      %p172 = scmp.ne.s32.totalorder %s160, %s161
      %p173 = scmp.eq.s32.totalorder %s27, 1
      %p174 = por %p172, %p173
      %p176 = scmp.ne.s32.totalorder %s161, %s175
      %p177 = scmp.eq.s32.totalorder %s27, 0
      %p178 = por %p176, %p177
      %s180 = sadd.s32 %s179, 1
      %p183 = scmp.eq.s32.totalorder %s21, 1
      %p184 = scmp.ne.s32.totalorder %s179, %s181
      %p185 = scmp.eq.s32.totalorder %s21, 0
      %p186 = por %p184, %p185
      %p187 = scmp.ne.s32.totalorder %s179, %s181
      %p188 = scmp.eq.s32.totalorder %s26, 1
      %p189 = por %p187, %p188
      %p190 = scmp.ne.s32.totalorder %s181, %s182
      %p191 = scmp.eq.s32.totalorder %s26, 0
      %p192 = por %p190, %p191
      %p193 = scmp.ne.s32.totalorder %s181, %s182
      %p194 = scmp.eq.s32.totalorder %s27, 1
      %p195 = por %p193, %p194
      %p197 = scmp.ne.s32.totalorder %s182, %s196
      %p198 = scmp.eq.s32.totalorder %s27, 0
      %p199 = por %p197, %p198
      %p200 = scmp.le.s32.totalorder 1, %s21
      %p201 = scmp.lt.s32.totalorder %s21, 3
      %p202 = pnand %p200, %p201
      %p203 = pneg %p202
      // Predicated region
      $region9: #{tpu_custom_call.1} parent=5 // pred_check
        _
      $region10: #{tpu_custom_call.1} parent=5 // pred_check_branch
        %205 = sbr.rel (%p202) target = $region12
      $region11: #{tpu_custom_call.1} parent=5 // pred_region
        %s206 = ssub.s32 %s21, 1
        // Predicated region
        $region13: #{tpu_custom_call.1} parent=11 // pred_check
          %p207 = pneg %p80
        $region14: #{tpu_custom_call.1} parent=11 // pred_check_branch
          %209 = sbr.rel (%p207) target = $region16
        $region15: #{tpu_custom_call.1} parent=11 // pred_region
          %s211 = ssub.s32 6144, 6144
          %212 = vsyncadd [#allocation8], %s211
          %s213 = sshll.u32 [#allocation7], 4
          %s214 = int_to_ptr.vmem [resolvable:$true] %s213
          %219 = dma.hbm_to_vmem [thread:$0]  %s1, 6144, %s214, [#allocation8], 128, 128, 8
        $region16: #{tpu_custom_call.1} parent=11 // pred_fallthru
          _
        // Predicated region
        $region17: #{tpu_custom_call.1} parent=11 // pred_check
          %p220 = pneg %p101
        $region18: #{tpu_custom_call.1} parent=11 // pred_check_branch
          %222 = sbr.rel (%p220) target = $region20
        $region19: #{tpu_custom_call.1} parent=11 // pred_region
          _
        $region20: #{tpu_custom_call.1} parent=11 // pred_fallthru
          _
        // Predicated region
        $region21: #{tpu_custom_call.1} parent=11 // pred_check
          %p223 = pneg %p122
        $region22: #{tpu_custom_call.1} parent=11 // pred_check_branch
          %225 = sbr.rel (%p223) target = $region24
        $region23: #{tpu_custom_call.1} parent=11 // pred_region
          _
        $region24: #{tpu_custom_call.1} parent=11 // pred_fallthru
          _
      $region12: #{tpu_custom_call.1} parent=5 // pred_fallthru
        _
      %p226 = scmp.lt.s32.totalorder %s21, 2
      // Predicated region
      $region25: #{tpu_custom_call.1} parent=5 // pred_check
        %p227 = pneg %p226
      $region26: #{tpu_custom_call.1} parent=5 // pred_check_branch
        %229 = sbr.rel (%p227) target = $region28
      $region27: #{tpu_custom_call.1} parent=5 // pred_region
        // Predicated region
        $region29: #{tpu_custom_call.1} parent=27 // pred_check
          %p230 = pneg %p53
        $region30: #{tpu_custom_call.1} parent=27 // pred_check_branch
          %232 = sbr.rel (%p230) target = $region32
        $region31: #{tpu_custom_call.1} parent=27 // pred_region
          %s233 = sand.u32 %s43, 1
          %s234 = scalar_lea.sflag [#allocation5], %s233
          %s235 = sand.u32 %s43, 1
          %s236 = smul.addr %s235, 24
          %s237 = scalar_lea.vmem [#allocation4], %s236
          %s239 = ssub.s32 384, 384
          %240 = vsyncadd %s234, %s239
          %s241 = smul.addr %s28, 3
          %s242 = smul.addr %s241, 128
          %s243 = scalar_lea.hbm %s0, %s242
          %s244 = sshll.u32 %s237, 4
          %s245 = int_to_ptr.vmem [resolvable:$true] %s244
          %250 = dma.hbm_to_vmem [thread:$0]  %s243, 384, %s245, %s234, 128, 128, 8
        $region32: #{tpu_custom_call.1} parent=27 // pred_fallthru
          _
      $region28: #{tpu_custom_call.1} parent=5 // pred_fallthru
        _
      %p251 = scmp.le.s32.totalorder 1, %s21
      %p252 = scmp.lt.s32.totalorder %s21, 3
      %p253 = pnand %p251, %p252
      %p254 = pneg %p253
      // Predicated region
      $region33: #{tpu_custom_call.1} parent=5 // pred_check
        _
      $region34: #{tpu_custom_call.1} parent=5 // pred_check_branch
        %256 = sbr.rel (%p253) target = $region36
      $region35: #{tpu_custom_call.1} parent=5 // pred_region
        %s257 = ssub.s32 %s21, 1
        %s258 = sand.u32 %s46, 1
        %s259 = scalar_lea.sflag [#allocation5], %s258
        %s260 = sand.u32 %s46, 1
        %s261 = smul.addr %s260, 24
        %s262 = scalar_lea.vmem [#allocation4], %s261
        // Predicated region
        $region37: #{tpu_custom_call.1} parent=35 // pred_check
          %p263 = pneg %p59
        $region38: #{tpu_custom_call.1} parent=35 // pred_check_branch
          %265 = sbr.rel (%p263) target = $region40
        $region39: #{tpu_custom_call.1} parent=35 // pred_region
          %266 = dma.done %s259, 384
        $region40: #{tpu_custom_call.1} parent=35 // pred_fallthru
          _
        // Predicated region
        $region41: #{tpu_custom_call.1} parent=35 // pred_check
          %p267 = pneg %p80
        $region42: #{tpu_custom_call.1} parent=35 // pred_check_branch
          %269 = sbr.rel (%p267) target = $region44
        $region43: #{tpu_custom_call.1} parent=35 // pred_region
          %270 = dma.done [#allocation8], 6144
        $region44: #{tpu_custom_call.1} parent=35 // pred_fallthru
          _
        %s271 = sand.u32 %s46, 1
        %s272 = scalar_lea.sflag [#allocation5], %s271
        %s273 = sand.u32 %s46, 1
        %s274 = smul.addr %s273, 24
        %s275 = scalar_lea.vmem [#allocation4], %s274
        %p276 = pneg %p59
        %p277 = pneg %p56
        %p278 = pneg %p80
        %p279 = pneg %p77
        %p280 = pneg %p101
        %p281 = pneg %p98
        %p282 = pneg %p122
        %p283 = pneg %p119
        %p284 = pneg %p150
        %p285 = pneg %p147
        %s286 = sand.u32 %s137, 1
        %s287 = scalar_lea.sflag [#allocation6], %s286
        %s288 = sand.u32 %s137, 1
        %s289 = smul.addr %s288, 16
        %s290 = scalar_lea.vmem [#allocation9], %s289
        %p291 = pneg %p171
        %p292 = pneg %p168
        %p293 = pneg %p192
        %p294 = pneg %p189
        %s295 = smul.u32 2, %s31
        %p296 = scmp.eq.s32.totalorder %s30, 0
        %p297 = scmp.eq.s32.totalorder %s31, 0
        %p298 = pnand %p296, %p297
        %p299 = pneg %p298
        // Predicated region
        $region45: #{tpu_custom_call.1} parent=35 // pred_check
          _
        $region46: #{tpu_custom_call.1} parent=35 // pred_check_branch
          %301 = sbr.rel (%p298) target = $region48
        $region47: #{tpu_custom_call.1} parent=35 // pred_region
          %302 = vst [vmem:[#allocation2] sm:$0x1] 0.0
          %303 = vst [vmem:[#allocation3] sm:$0x1] 0.0
        $region48: #{tpu_custom_call.1} parent=35 // pred_fallthru
          _
        %s304 = smul.u32 %s31, 16
        %s305 = scalar_lea.vmem %s262, %s304 [#allocation4]
        %v306 = vld [vmem:[%s305] sm:$0xff]
        %v307 = vld [vmem:[%s305 + $0x8] sm:$0xff]
        %v308 = vld [vmem:[#allocation7] sm:$0xff]
        %v309 = vld [vmem:[#allocation7 + $0x8] sm:$0xff]
        %v310 = vld [vmem:[#allocation7 + $0x10] sm:$0xff]
        %v311 = vld [vmem:[#allocation7 + $0x18] sm:$0xff]
        %v312 = vld [vmem:[#allocation7 + $0x20] sm:$0xff]
        %v313 = vld [vmem:[#allocation7 + $0x28] sm:$0xff]
        %v314 = vld [vmem:[#allocation7 + $0x30] sm:$0xff]
        %v315 = vld [vmem:[#allocation7 + $0x38] sm:$0xff]
        %v316 = vld [vmem:[#allocation7 + $0x40] sm:$0xff]
        %v317 = vld [vmem:[#allocation7 + $0x48] sm:$0xff]
        %v318 = vld [vmem:[#allocation7 + $0x50] sm:$0xff]
        %v319 = vld [vmem:[#allocation7 + $0x58] sm:$0xff]
        %v320 = vld [vmem:[#allocation7 + $0x60] sm:$0xff]
        %v321 = vld [vmem:[#allocation7 + $0x68] sm:$0xff]
        %v322 = vld [vmem:[#allocation7 + $0x70] sm:$0xff]
        %v323 = vld [vmem:[#allocation7 + $0x78] sm:$0xff]
        %s324 = sadd.s32 %s304, 1
        %s325 = scalar_lea.vmem %s262, %s324 [#allocation4]
        %v326 = vld [vmem:[%s325] sm:$0xff]
        %v327 = vld [vmem:[%s325 + $0x8] sm:$0xff]
        %s328 = scalar_lea.vmem [#allocation7], 128
        %v329 = vld [vmem:[%s328] sm:$0xff]
        %v330 = vld [vmem:[%s328 + $0x8] sm:$0xff]
        %v331 = vld [vmem:[%s328 + $0x10] sm:$0xff]
        %v332 = vld [vmem:[%s328 + $0x18] sm:$0xff]
        %v333 = vld [vmem:[%s328 + $0x20] sm:$0xff]
        %v334 = vld [vmem:[%s328 + $0x28] sm:$0xff]
        %v335 = vld [vmem:[%s328 + $0x30] sm:$0xff]
        %v336 = vld [vmem:[%s328 + $0x38] sm:$0xff]
        %v337 = vld [vmem:[%s328 + $0x40] sm:$0xff]
        %v338 = vld [vmem:[%s328 + $0x48] sm:$0xff]
        %v339 = vld [vmem:[%s328 + $0x50] sm:$0xff]
        %v340 = vld [vmem:[%s328 + $0x58] sm:$0xff]
        %v341 = vld [vmem:[%s328 + $0x60] sm:$0xff]
        %v342 = vld [vmem:[%s328 + $0x68] sm:$0xff]
        %v343 = vld [vmem:[%s328 + $0x70] sm:$0xff]
        %v344 = vld [vmem:[%s328 + $0x78] sm:$0xff]
        %345 = vmatprep.subr.mxu0 0.0
        %346 = vmatpush1.msra.mxu0 %v329
        %347 = vmatprep.subr.mxu0 0.0
        %348 = vmatpush1.msra.mxu0 %v330
        %349 = vmatprep.subr.mxu0 0.0
        %350 = vmatpush1.msra.mxu0 %v331
        %351 = vmatprep.subr.mxu0 0.0
        %352 = vmatpush1.msra.mxu0 %v332
        %353 = vmatprep.subr.mxu0 0.0
        %354 = vmatpush1.msra.mxu0 %v333
        %355 = vmatprep.subr.mxu0 0.0
        %356 = vmatpush1.msra.mxu0 %v334
        %357 = vmatprep.subr.mxu0 0.0
        %358 = vmatpush1.msra.mxu0 %v335
        %359 = vmatprep.subr.mxu0 0.0
        %360 = vmatpush1.msra.mxu0 %v336
        %361 = vmatprep.subr.mxu0 0.0
        %362 = vmatpush1.msra.mxu0 %v337
        %363 = vmatprep.subr.mxu0 0.0
        %364 = vmatpush1.msra.mxu0 %v338
        %365 = vmatprep.subr.mxu0 0.0
        %366 = vmatpush1.msra.mxu0 %v339
        %367 = vmatprep.subr.mxu0 0.0
        %368 = vmatpush1.msra.mxu0 %v340
        %369 = vmatprep.subr.mxu0 0.0
        %370 = vmatpush1.msra.mxu0 %v341
        %371 = vmatprep.subr.mxu0 0.0
        %372 = vmatpush1.msra.mxu0 %v342
        %373 = vmatprep.subr.mxu0 0.0
        %374 = vmatpush1.msra.mxu0 %v343
        %375 = vmatprep.subr.mxu0 0.0
        %376 = vmatpush1.msra.mxu0 %v344
        %377 = vmatprep.subr.mxu0 0.0
        %378 = vmatpush1.msra.mxu0 0.0
        %379 = vmatprep.subr.mxu0 0.0
        %380 = vmatpush1.msra.mxu0 0.0
        %381 = vmatprep.subr.mxu0 0.0
        %382 = vmatpush1.msra.mxu0 0.0
        %383 = vmatprep.subr.mxu0 0.0
        %384 = vmatpush1.msra.mxu0 0.0
        %385 = vmatprep.subr.mxu0 0.0
        %386 = vmatpush1.msra.mxu0 0.0
        %387 = vmatprep.subr.mxu0 0.0
        %388 = vmatpush1.msra.mxu0 0.0
        %389 = vmatprep.subr.mxu0 0.0
        %390 = vmatpush1.msra.mxu0 0.0
        %391 = vmatprep.subr.mxu0 0.0
        %392 = vmatpush1.msra.mxu0 0.0
        %393 = vmatprep.subr.mxu0 0.0
        %394 = vmatpush1.msra.mxu0 0.0
        %395 = vmatprep.subr.mxu0 0.0
        %396 = vmatpush1.msra.mxu0 0.0
        %397 = vmatprep.subr.mxu0 0.0
        %398 = vmatpush1.msra.mxu0 0.0
        %399 = vmatprep.subr.mxu0 0.0
        %400 = vmatpush1.msra.mxu0 0.0
        %401 = vmatprep.subr.mxu0 0.0
        %402 = vmatpush1.msra.mxu0 0.0
        %403 = vmatprep.subr.mxu0 0.0
        %404 = vmatpush1.msra.mxu0 0.0
        %405 = vmatprep.subr.mxu0 0.0
        %406 = vmatpush1.msra.mxu0 0.0
        %407 = vmatprep.subr.mxu0 0.0
        %408 = vmatpush1.msra.mxu0 0.0
        %409 = vmatprep.mubr.f32.mxu0 0.0
        %410 = vmatmul.mubr.f32.gmra.mrb[0].mxu0 %v326
        %v411 = vpop.f32.mrb[0].mxu0
        %v412 = vadd.f32 0.0, %v411
        %v413 = vpop.f32.mrb[0].mxu0
        %414 = vmatprep.mubr.f32.mxu0 0.0
        %415 = vmatmul.mubr.f32.gmra.mrb[0].mxu0 %v327
        %v416 = vpop.f32.mrb[0].mxu0
        %v417 = vadd.f32 0.0, %v416
        %v418 = vpop.f32.mrb[0].mxu0
        %419 = vdwg.mxu0
        %420 = vmatprep.subr.mxu0 0.0
        %421 = vmatpush1.msra.mxu0 %v308
        %422 = vmatprep.subr.mxu0 0.0
        %423 = vmatpush1.msra.mxu0 %v309
        %424 = vmatprep.subr.mxu0 0.0
        %425 = vmatpush1.msra.mxu0 %v310
        %426 = vmatprep.subr.mxu0 0.0
        %427 = vmatpush1.msra.mxu0 %v311
        %428 = vmatprep.subr.mxu0 0.0
        %429 = vmatpush1.msra.mxu0 %v312
        %430 = vmatprep.subr.mxu0 0.0
        %431 = vmatpush1.msra.mxu0 %v313
        %432 = vmatprep.subr.mxu0 0.0
        %433 = vmatpush1.msra.mxu0 %v314
        %434 = vmatprep.subr.mxu0 0.0
        %435 = vmatpush1.msra.mxu0 %v315
        %436 = vmatprep.subr.mxu0 0.0
        %437 = vmatpush1.msra.mxu0 %v316
        %438 = vmatprep.subr.mxu0 0.0
        %439 = vmatpush1.msra.mxu0 %v317
        %440 = vmatprep.subr.mxu0 0.0
        %441 = vmatpush1.msra.mxu0 %v318
        %442 = vmatprep.subr.mxu0 0.0
        %443 = vmatpush1.msra.mxu0 %v319
        %444 = vmatprep.subr.mxu0 0.0
        %445 = vmatpush1.msra.mxu0 %v320
        %446 = vmatprep.subr.mxu0 0.0
        %447 = vmatpush1.msra.mxu0 %v321
        %448 = vmatprep.subr.mxu0 0.0
        %449 = vmatpush1.msra.mxu0 %v322
        %450 = vmatprep.subr.mxu0 0.0
        %451 = vmatpush1.msra.mxu0 %v323
        %452 = vmatprep.subr.mxu0 0.0
        %453 = vmatpush1.msra.mxu0 0.0
        %454 = vmatprep.subr.mxu0 0.0
        %455 = vmatpush1.msra.mxu0 0.0
        %456 = vmatprep.subr.mxu0 0.0
        %457 = vmatpush1.msra.mxu0 0.0
        %458 = vmatprep.subr.mxu0 0.0
        %459 = vmatpush1.msra.mxu0 0.0
        %460 = vmatprep.subr.mxu0 0.0
        %461 = vmatpush1.msra.mxu0 0.0
        %462 = vmatprep.subr.mxu0 0.0
        %463 = vmatpush1.msra.mxu0 0.0
        %464 = vmatprep.subr.mxu0 0.0
        %465 = vmatpush1.msra.mxu0 0.0
        %466 = vmatprep.subr.mxu0 0.0
        %467 = vmatpush1.msra.mxu0 0.0
        %468 = vmatprep.subr.mxu0 0.0
        %469 = vmatpush1.msra.mxu0 0.0
        %470 = vmatprep.subr.mxu0 0.0
        %471 = vmatpush1.msra.mxu0 0.0
        %472 = vmatprep.subr.mxu0 0.0
        %473 = vmatpush1.msra.mxu0 0.0
        %474 = vmatprep.subr.mxu0 0.0
        %475 = vmatpush1.msra.mxu0 0.0
        %476 = vmatprep.subr.mxu0 0.0
        %477 = vmatpush1.msra.mxu0 0.0
        %478 = vmatprep.subr.mxu0 0.0
        %479 = vmatpush1.msra.mxu0 0.0
        %480 = vmatprep.subr.mxu0 0.0
        %481 = vmatpush1.msra.mxu0 0.0
        %482 = vmatprep.subr.mxu0 0.0
        %483 = vmatpush1.msra.mxu0 0.0
        %484 = vmatprep.mubr.f32.mxu0 0.0
        %485 = vmatmul.mubr.f32.gmra.mrb[0].mxu0 %v306
        %v486 = vpop.f32.mrb[0].mxu0
        %v487 = vadd.f32 %v412, %v486
        %v488 = vpop.f32.mrb[0].mxu0
        %489 = vmatprep.mubr.f32.mxu0 0.0
        %490 = vmatmul.mubr.f32.gmra.mrb[0].mxu0 %v307
        %v491 = vpop.f32.mrb[0].mxu0
        %v492 = vadd.f32 %v417, %v491
        %v493 = vpop.f32.mrb[0].mxu0
        %494 = vdwg.mxu0
        %s495 = sadd.s32 %s304, 2
        %s496 = scalar_lea.vmem %s262, %s495 [#allocation4]
        %v497 = vld [vmem:[%s496] sm:$0xff]
        %v498 = vld [vmem:[%s496 + $0x8] sm:$0xff]
        %s499 = scalar_lea.vmem [#allocation7], 256
        %v500 = vld [vmem:[%s499] sm:$0xff]
        %v501 = vld [vmem:[%s499 + $0x8] sm:$0xff]
        %v502 = vld [vmem:[%s499 + $0x10] sm:$0xff]
        %v503 = vld [vmem:[%s499 + $0x18] sm:$0xff]
        %v504 = vld [vmem:[%s499 + $0x20] sm:$0xff]
        %v505 = vld [vmem:[%s499 + $0x28] sm:$0xff]
        %v506 = vld [vmem:[%s499 + $0x30] sm:$0xff]
        %v507 = vld [vmem:[%s499 + $0x38] sm:$0xff]
        %v508 = vld [vmem:[%s499 + $0x40] sm:$0xff]
        %v509 = vld [vmem:[%s499 + $0x48] sm:$0xff]
        %v510 = vld [vmem:[%s499 + $0x50] sm:$0xff]
        %v511 = vld [vmem:[%s499 + $0x58] sm:$0xff]
        %v512 = vld [vmem:[%s499 + $0x60] sm:$0xff]
        %v513 = vld [vmem:[%s499 + $0x68] sm:$0xff]
        %v514 = vld [vmem:[%s499 + $0x70] sm:$0xff]
        %v515 = vld [vmem:[%s499 + $0x78] sm:$0xff]
        %516 = vmatprep.subr.mxu0 0.0
        %517 = vmatpush1.msra.mxu0 %v500
        %518 = vmatprep.subr.mxu0 0.0
        %519 = vmatpush1.msra.mxu0 %v501
        %520 = vmatprep.subr.mxu0 0.0
        %521 = vmatpush1.msra.mxu0 %v502
        %522 = vmatprep.subr.mxu0 0.0
        %523 = vmatpush1.msra.mxu0 %v503
        %524 = vmatprep.subr.mxu0 0.0
        %525 = vmatpush1.msra.mxu0 %v504
        %526 = vmatprep.subr.mxu0 0.0
        %527 = vmatpush1.msra.mxu0 %v505
        %528 = vmatprep.subr.mxu0 0.0
        %529 = vmatpush1.msra.mxu0 %v506
        %530 = vmatprep.subr.mxu0 0.0
        %531 = vmatpush1.msra.mxu0 %v507
        %532 = vmatprep.subr.mxu0 0.0
        %533 = vmatpush1.msra.mxu0 %v508
        %534 = vmatprep.subr.mxu0 0.0
        %535 = vmatpush1.msra.mxu0 %v509
        %536 = vmatprep.subr.mxu0 0.0
        %537 = vmatpush1.msra.mxu0 %v510
        %538 = vmatprep.subr.mxu0 0.0
        %539 = vmatpush1.msra.mxu0 %v511
        %540 = vmatprep.subr.mxu0 0.0
        %541 = vmatpush1.msra.mxu0 %v512
        %542 = vmatprep.subr.mxu0 0.0
        %543 = vmatpush1.msra.mxu0 %v513
        %544 = vmatprep.subr.mxu0 0.0
        %545 = vmatpush1.msra.mxu0 %v514
        %546 = vmatprep.subr.mxu0 0.0
        %547 = vmatpush1.msra.mxu0 %v515
        %548 = vmatprep.subr.mxu0 0.0
        %549 = vmatpush1.msra.mxu0 0.0
        %550 = vmatprep.subr.mxu0 0.0
        %551 = vmatpush1.msra.mxu0 0.0
        %552 = vmatprep.subr.mxu0 0.0
        %553 = vmatpush1.msra.mxu0 0.0
        %554 = vmatprep.subr.mxu0 0.0
        %555 = vmatpush1.msra.mxu0 0.0
        %556 = vmatprep.subr.mxu0 0.0
        %557 = vmatpush1.msra.mxu0 0.0
        %558 = vmatprep.subr.mxu0 0.0
        %559 = vmatpush1.msra.mxu0 0.0
        %560 = vmatprep.subr.mxu0 0.0
        %561 = vmatpush1.msra.mxu0 0.0
        %562 = vmatprep.subr.mxu0 0.0
        %563 = vmatpush1.msra.mxu0 0.0
        %564 = vmatprep.subr.mxu0 0.0
        %565 = vmatpush1.msra.mxu0 0.0
        %566 = vmatprep.subr.mxu0 0.0
        %567 = vmatpush1.msra.mxu0 0.0
        %568 = vmatprep.subr.mxu0 0.0
        %569 = vmatpush1.msra.mxu0 0.0
        %570 = vmatprep.subr.mxu0 0.0
        %571 = vmatpush1.msra.mxu0 0.0
        %572 = vmatprep.subr.mxu0 0.0
        %573 = vmatpush1.msra.mxu0 0.0
        %574 = vmatprep.subr.mxu0 0.0
        %575 = vmatpush1.msra.mxu0 0.0
        %576 = vmatprep.subr.mxu0 0.0
        %577 = vmatpush1.msra.mxu0 0.0
        %578 = vmatprep.subr.mxu0 0.0
        %579 = vmatpush1.msra.mxu0 0.0
        %580 = vmatprep.mubr.f32.mxu0 0.0
        %581 = vmatmul.mubr.f32.gmra.mrb[0].mxu0 %v497
        %v582 = vpop.f32.mrb[0].mxu0
        %v583 = vadd.f32 0.0, %v582
        %v584 = vpop.f32.mrb[0].mxu0
        %585 = vmatprep.mubr.f32.mxu0 0.0
        %586 = vmatmul.mubr.f32.gmra.mrb[0].mxu0 %v498
        %v587 = vpop.f32.mrb[0].mxu0
        %v588 = vadd.f32 0.0, %v587
        %v589 = vpop.f32.mrb[0].mxu0
        %590 = vdwg.mxu0
        %v591 = vadd.f32 %v487, %v583
        %v592 = vadd.f32 %v492, %v588
        %v593 = vmax.f32 %v591, 0.0
        %v594 = vmax.f32 %v592, 0.0
        %595 = vst [vmem:[%s290] sm:$0xff] %v593
        %596 = vst [vmem:[%s290 + $0x8] sm:$0xff] %v594
        %v597 = vld [vmem:[#allocation2] sm:$0x1]
        %v598 = vadd.f32 %v593, %v594
        %v599 = vrot.slane %v598, 4
        %v600 = vadd.f32 %v598, %v599
        %v601 = vrot.slane %v600, 2
        %v602 = vadd.f32 %v600, %v601
        %v603 = vrot.slane %v602, 1
        %v604 = vadd.f32 %v602, %v603
        %v605 = vadd.f32 %v597, %v604
        %606 = vst [vmem:[#allocation2] sm:$0x1] %v605
        %v607 = vld [vmem:[#allocation3] sm:$0x1]
        %v608 = vmul.f32 %v593, %v593
        %v609 = vmul.f32 %v594, %v594
        %v610 = vadd.f32 %v608, %v609
        %v611 = vrot.slane %v610, 4
        %v612 = vadd.f32 %v610, %v611
        %v613 = vrot.slane %v612, 2
        %v614 = vadd.f32 %v612, %v613
        %v615 = vrot.slane %v614, 1
        %v616 = vadd.f32 %v614, %v615
        %v617 = vadd.f32 %v607, %v616
        %618 = vst [vmem:[#allocation3] sm:$0x1] %v617
        %p619 = scmp.eq.s32.totalorder %s30, 1
        %p620 = pnand %p619, %p297
        %p621 = pneg %p620
        // Predicated region
        $region49: #{tpu_custom_call.1} parent=35 // pred_check
          _
        $region50: #{tpu_custom_call.1} parent=35 // pred_check_branch
          %623 = sbr.rel (%p620) target = $region52
        $region51: #{tpu_custom_call.1} parent=35 // pred_region
          %v624 = vld [vmem:[#allocation2] sm:$0x1]
          %v625 = vmul.f32 %v624, 0.03125
          %v626 = vld [vmem:[#allocation3] sm:$0x1]
          %v627 = vmul.f32 %v626, 0.03125
          %v628 = vmul.f32 %v625, %v625
          %v629 = vsub.f32 %v627, %v628
          %v630 = vmax.f32 %v629, 0.0
          %v631 = vld [vmem:[%s2] sm:$0x1]
          %v632 = vadd.f32 %v630, 1e-05
          %v633 = vrsqrt.pop %v632
          %v634 = vmul.f32 %v631, %v633
          %635 = vst [vmem:[#allocation10] sm:$0x1] %v634
          %v636 = vld [vmem:[%s3] sm:$0x1]
          %v637 = vmul.f32 %v625, %v634
          %v638 = vsub.f32 %v636, %v637
          %639 = vst [vmem:[#allocation12] sm:$0x1] %v638
        $region52: #{tpu_custom_call.1} parent=35 // pred_fallthru
          _
        %s640 = sand.u32 %s137, 1
        %s641 = scalar_lea.sflag [#allocation6], %s640
        %s642 = sand.u32 %s137, 1
        %s643 = smul.addr %s642, 16
        %s644 = scalar_lea.vmem [#allocation9], %s643
        // Predicated region
        $region53: #{tpu_custom_call.1} parent=35 // pred_check
          %p645 = pneg %p147
        $region54: #{tpu_custom_call.1} parent=35 // pred_check_branch
          %647 = sbr.rel (%p645) target = $region56
        $region55: #{tpu_custom_call.1} parent=35 // pred_region
          %s648 = smul.u32 2, %s31
          %s650 = ssub.s32 256, 256
          %651 = vsyncadd %s641, %s650
          %s652 = smul.addr %s30, 2
          %s653 = sadd.s32 %s648, %s652
          %s654 = smul.addr %s653, 128
          %s655 = scalar_lea.hbm %s4, %s654
          %s656 = sshll.u32 %s644, 4
          %s657 = int_to_ptr.vmem [resolvable:$true] %s656
          %662 = dma.vmem_to_hbm [thread:$0]  %s657, 256, %s655, %s641, 128, 128, 8
        $region56: #{tpu_custom_call.1} parent=35 // pred_fallthru
          _
        // Predicated region
        $region57: #{tpu_custom_call.1} parent=35 // pred_check
          %p663 = pneg %p168
        $region58: #{tpu_custom_call.1} parent=35 // pred_check_branch
          %665 = sbr.rel (%p663) target = $region60
        $region59: #{tpu_custom_call.1} parent=35 // pred_region
          %s667 = ssub.s32 16, 16
          %668 = vsyncadd [#allocation11], %s667
          %s670 = sshll.u32 [#allocation10], 4
          %s671 = int_to_ptr.vmem [resolvable:$true] %s670
          %673 = dma.vmem_to_hbm [thread:$0]  %s671, 16, %s5, [#allocation11]
        $region60: #{tpu_custom_call.1} parent=35 // pred_fallthru
          _
        // Predicated region
        $region61: #{tpu_custom_call.1} parent=35 // pred_check
          %p674 = pneg %p189
        $region62: #{tpu_custom_call.1} parent=35 // pred_check_branch
          %676 = sbr.rel (%p674) target = $region64
        $region63: #{tpu_custom_call.1} parent=35 // pred_region
          %s678 = ssub.s32 16, 16
          %679 = vsyncadd [#allocation11], %s678
          %s681 = sshll.u32 [#allocation12], 4
          %s682 = int_to_ptr.vmem [resolvable:$true] %s681
          %684 = dma.vmem_to_hbm [thread:$0]  %s682, 16, %s6, [#allocation11]
        $region64: #{tpu_custom_call.1} parent=35 // pred_fallthru
          _
        // Predicated region
        $region65: #{tpu_custom_call.1} parent=35 // pred_check
          %p685 = pneg %p168
        $region66: #{tpu_custom_call.1} parent=35 // pred_check_branch
          %687 = sbr.rel (%p685) target = $region68
        $region67: #{tpu_custom_call.1} parent=35 // pred_region
          %688 = dma.done [#allocation11], 16
        $region68: #{tpu_custom_call.1} parent=35 // pred_fallthru
          _
        // Predicated region
        $region69: #{tpu_custom_call.1} parent=35 // pred_check
          %p689 = pneg %p189
        $region70: #{tpu_custom_call.1} parent=35 // pred_check_branch
          %691 = sbr.rel (%p689) target = $region72
        $region71: #{tpu_custom_call.1} parent=35 // pred_region
          %692 = dma.done [#allocation11], 16
        $region72: #{tpu_custom_call.1} parent=35 // pred_fallthru
          _
      $region36: #{tpu_custom_call.1} parent=5 // pred_fallthru
        _
      %p693 = scmp.le.s32.totalorder 2, %s21
      // Predicated region
      $region73: #{tpu_custom_call.1} parent=5 // pred_check
        %p694 = pneg %p693
      $region74: #{tpu_custom_call.1} parent=5 // pred_check_branch
        %696 = sbr.rel (%p694) target = $region76
      $region75: #{tpu_custom_call.1} parent=5 // pred_region
        %s697 = ssub.s32 %s21, 2
        // Predicated region
        $region77: #{tpu_custom_call.1} parent=75 // pred_check
          %p698 = pneg %p153
        $region78: #{tpu_custom_call.1} parent=75 // pred_check_branch
          %700 = sbr.rel (%p698) target = $region80
        $region79: #{tpu_custom_call.1} parent=75 // pred_region
          %s701 = sand.u32 %s138, 1
          %s702 = scalar_lea.sflag [#allocation6], %s701
          %s703 = sand.u32 %s138, 1
          %s704 = smul.addr %s703, 16
          %s705 = scalar_lea.vmem [#allocation9], %s704
          %706 = dma.done %s702, 256
        $region80: #{tpu_custom_call.1} parent=75 // pred_fallthru
          _
      $region76: #{tpu_custom_call.1} parent=5 // pred_fallthru
        _
    $region6: #{tpu_custom_call.1} parent=1 // loop_footer
      %s25 = sadd.s32 1, %s21
    $region7: #{tpu_custom_call.1} parent=1 // loop_footer_branch
      %20 = sbr.rel target = $region3
    $region8: #{tpu_custom_call.1} parent=1 // loop_exit
      _
    %707 = vsyncpa [#allocation5], 1
    %s708 = scalar_lea.sflag [#allocation5], 1
    %709 = vsyncpa %s708, 1
    %710 = vsyncpa [#allocation8], 1
    %711 = vsyncpa [#allocation6], 1
    %s712 = scalar_lea.sflag [#allocation6], 1
    %713 = vsyncpa %s712, 1
    %714 = vsyncpa [#allocation11], 1

</llo_original>
